<compile_context>
chip_gen: v7x
topology: tpu7x:2x2x1
jax: 0.10.0
libtpu: 0.0.40
codegen_flags: <defaults>
</compile_context>

<pallas_src>
import functools

import jax
import jax.numpy as jnp
import numpy as np
from jax import lax
from jax.experimental import pallas as pl
from jax.experimental.pallas import tpu as pltpu


def _scatter_kernel(offsets_ref, sidx_ref, pillars_ref, out_ref, scr_ref, *,
                    tile_s, c, debug_oob_guard):
    """One grid step == (batch b, spatial tile j).

    offsets_ref : SMEM int32[B*num_tiles + 1]  (scalar-prefetched)
                  offsets_ref[t] = first sorted pillar of tile t = b*num_tiles+j.
    sidx_ref    : SMEM int32[N]   per-pillar flat spatial index (sorted order).
    pillars_ref : VMEM  [N, C]    pillar features (sorted, single-buffered).
    out_ref     : VMEM  [C, TILE_S]       channel-major output block (lane-dense).
    scr_ref     : VMEM  [TILE_S, C_pad]   spatial-major scatter scratch.
    """
    j = pl.program_id(1)
    t = pl.program_id(0) * pl.num_programs(1) + j
    start = offsets_ref[t]
    end = offsets_ref[t + 1]
    tile_base = j * tile_s

    @pl.when(start == end)
    def _():
        # Empty tile: lane-dense zero store straight to the output block;
        # no scratch fill, no transpose.
        out_ref[...] = jnp.zeros_like(out_ref)

    @pl.when(start < end)
    def _():
        # Dense grid starts at zero, exactly like torch.zeros(...) in the module.
        scr_ref[...] = jnp.zeros_like(scr_ref)

        # TODO(synk): unroll this loop over fixed sub-chunks (dynamic bounds
        # prevent lax.fori_loop(unroll=...)) if the scatter phase ever shows up
        # as scalar-slot bound; zero-fill/store dominate at BEV densities.
        def body(p, carry):
            local = sidx_ref[p] - tile_base

            def write():
                # Contiguous C-wide row write into the spatial-major scratch.
                scr_ref[pl.ds(local, 1), pl.ds(0, c)] = pillars_ref[pl.ds(p, 1), :]

            if debug_oob_guard:
                # Redundant for well-formed inputs (sort + searchsorted already
                # guarantee tile membership); kept behind a debug flag because
                # VMEM writes are not runtime bounds-checked.
                pl.when(jnp.logical_and(local >= 0, local < tile_s))(write)
            else:
                write()
            return carry

        lax.fori_loop(start, end, body, 0)

        # Fused NCHW layout: one in-kernel 2D transpose (spatial-major ->
        # channel-major), then a lane-dense store of the (C, TILE_S) block.
        out_ref[...] = jnp.transpose(scr_ref[...], (1, 0))[0:c, :]


def _choose_tile_s(s, c, c_pad, itemsize, pillar_bytes, vmem_cap_bytes,
                   target_out_tile_bytes=8 << 20):
    """Spatial tile length (lane dim of the output block).

    Constraints: multiple of 128 (lane-dense stores) unless a single tile
    covers S; double-buffered out block + scratch + resident pillar table must
    fit VMEM (chip-aware); ~8 MiB output blocks to amortize the ~0.35 us/step
    grid overhead on v5e/v6e.
    """
    # VMEM bytes per spatial row: 2x out-block rows (double buffer) + 1 scratch row.
    per_row = (2 * c + c_pad) * itemsize
    budget = vmem_cap_bytes - pillar_bytes - (8 << 20)   # headroom
    if budget < 128 * per_row:
        budget = 128 * per_row                            # last resort (tiny tile)
    rows_budget = budget // per_row
    rows_target = max(128, target_out_tile_bytes // (c * itemsize))
    rows = int(min(rows_budget, rows_target))
    if rows >= s:
        return s                                          # one tile spans all of S
    return max(128, (rows // 128) * 128)


def pointpillar_scatter3d(pillar_features, voxel_coords, *, nx, ny, nz,
                          batch_size, tile_s=None, debug_oob_guard=False):
    """Returns spatial_features with shape [B, C*nz, ny, nx] (NCHW)."""
    n, c = pillar_features.shape
    s = nz * ny * nx
    itemsize = jnp.dtype(pillar_features.dtype).itemsize
    c_pad = ((c + 127) // 128) * 128          # pad scratch lanes -> native transpose
    pillar_bytes = n * c * itemsize

    # Chip-aware VMEM capacity (v7x: 64 MiB, v5e/v6e: 128 MiB).
    try:
        vmem_cap = int(pltpu.get_tpu_info().vmem_capacity_bytes)
    except Exception:
        vmem_cap = 64 << 20                    # conservative floor (v7x)

    if tile_s is None:
        tile_s = _choose_tile_s(s, c, c_pad, itemsize, pillar_bytes, vmem_cap)
    assert tile_s == s or tile_s % 128 == 0, (s, tile_s)
    # tile_s is a multiple of 128 (or == S), which also satisfies sublane
    # packing for f32/bf16/int8 scratch blocks (8/16/32-row requirements).
    num_tiles = pl.cdiv(s, tile_s)             # ragged last tile handled by Pallas

    # ---- XLA-side prep (cheap: operates only on the small [N] pillar axis) ----
    coords = voxel_coords.astype(jnp.int32)
    bidx = coords[:, 0]
    sidx = coords[:, 1] * (ny * nx) + coords[:, 2] * nx + coords[:, 3]
    valid = (bidx >= 0) & (bidx < batch_size) & (sidx >= 0) & (sidx < s)

    # Stable sort by (batch, spatial index); invalid / padded pillars get a
    # sentinel key so they sort to the end and are excluded by the offsets.
    key = jnp.where(valid, bidx * s + sidx, batch_size * s)
    order = jnp.argsort(key, stable=True)
    key_sorted = key[order]
    sidx_sorted = jnp.where(valid, sidx, 0)[order].astype(jnp.int32)
    pillars_sorted = pillar_features[order]

    # offsets[t] = first sorted pillar of tile t = b*num_tiles + j
    # (key = b*S + sidx, tile boundary = b*S + j*TILE_S).
    t_idx = jnp.arange(batch_size * num_tiles + 1, dtype=jnp.int32)
    boundaries = (t_idx // num_tiles) * s + (t_idx % num_tiles) * tile_s
    offsets = jnp.searchsorted(key_sorted, boundaries, side="left").astype(jnp.int32)
    # TODO(synk): at production N (~100k+ pillars) the int32[N] SMEM prefetch of
    # sidx may not fit; switch to per-tile slice DMA of sidx + pillar rows then.

    # VMEM budget: single-buffered pillar table + double-buffered out block
    # + scatter scratch, clamped to the chip's physical capacity.
    vmem_need = pillar_bytes + 2 * tile_s * c * itemsize + tile_s * c_pad * itemsize
    vmem_limit = int(min(vmem_cap - (4 << 20), max(vmem_need + (2 << 20), 32 << 20)))

    kernel = functools.partial(_scatter_kernel, tile_s=tile_s, c=c,
                               debug_oob_guard=debug_oob_guard)

    out = pl.pallas_call(
        kernel,
        out_shape=jax.ShapeDtypeStruct((batch_size, c, s), pillar_features.dtype),
        grid_spec=pltpu.PrefetchScalarGridSpec(
            num_scalar_prefetch=2,             # offsets, sidx_sorted -> SMEM
            grid=(batch_size, num_tiles),
            in_specs=[
                # Whole pillar table resident in VMEM, un-pipelined (single
                # buffer) -- fetched once, random-accessed by the scatter loop.
                # TODO(synk): for very large N, move to memory_space=pl.ANY and
                # DMA only rows [offsets[t], offsets[t+1]) per tile.
                pl.BlockSpec(memory_space=pltpu.MemorySpace.VMEM),
            ],
            out_specs=pl.BlockSpec((None, c, tile_s),
                                   lambda b, j, offs, sidx: (b, 0, j)),
            scratch_shapes=[pltpu.VMEM((tile_s, c_pad), pillar_features.dtype)],
        ),
        compiler_params=pltpu.CompilerParams(
            dimension_semantics=("parallel", "parallel"),
            vmem_limit_bytes=vmem_limit,
        ),
        cost_estimate=pl.CostEstimate(
            flops=0, transcendentals=0,
            bytes_accessed=int(batch_size * c * s * itemsize + n * c * itemsize)),
    )(offsets, sidx_sorted, pillars_sorted)

    # [B, C, S] -> [B, C*nz, ny, nx] is a pure (free) reshape: channel = c*nz+z,
    # exactly torch's .view on the channel-major dense tensor.
    return out.reshape(batch_size, c * nz, ny, nx)


if __name__ == "__main__":
    # Small config consistent with the module:
    #   INPUT_SHAPE = (nx, ny, nz), NUM_BEV_FEATURES, C = NUM_BEV_FEATURES // nz
    nx, ny, nz = 16, 16, 2
    num_bev_features = 64
    c_before = num_bev_features // nz          # 32
    batch_size = 2
    pillars_per_batch = 20
    n_pad = 4                                  # padded/invalid pillars (batch_idx = -1)
    n = batch_size * pillars_per_batch + n_pad
    s = nz * ny * nx                           # 512

    key = jax.random.PRNGKey(0)
    k_feat, k_coord = jax.random.split(key)
    pillar_features = jax.random.normal(k_feat, (n, c_before), dtype=jnp.float32)

    # Unique (z, y, x) per batch so scatter-assignment is well defined.
    coords_list = []
    for b in range(batch_size):
        kb = jax.random.fold_in(k_coord, b)
        flat = jax.random.permutation(kb, s)[:pillars_per_batch]
        z = (flat // (ny * nx)).astype(jnp.int32)
        y = ((flat // nx) % ny).astype(jnp.int32)
        x = (flat % nx).astype(jnp.int32)
        bcol = jnp.full((pillars_per_batch,), b, dtype=jnp.int32)
        coords_list.append(jnp.stack([bcol, z, y, x], axis=1))
    # Padded pillars with batch_idx = -1 must be ignored by the scatter.
    coords_list.append(jnp.full((n_pad, 4), -1, dtype=jnp.int32))
    voxel_coords = jnp.concatenate(coords_list, axis=0)

    # batch_size = coords[:, 0].max() + 1  (host-side scalar, like .item()).
    inferred_batch_size = int(jnp.max(voxel_coords[:, 0])) + 1

    out = pointpillar_scatter3d(
        pillar_features, voxel_coords,
        nx=nx, ny=ny, nz=nz, batch_size=inferred_batch_size,
        tile_s=128,   # force the multi-tile path (grid = (2, 4)) at toy size
    )
    out = jax.block_until_ready(out)

    # NumPy reference with exact PyTorch semantics.
    pf = np.asarray(pillar_features)
    co = np.asarray(voxel_coords)
    ref = np.zeros((inferred_batch_size, c_before, nz * ny * nx), dtype=pf.dtype)
    for b in range(inferred_batch_size):
        m = co[:, 0] == b
        tc = co[m]
        idx = tc[:, 1] * ny * nx + tc[:, 2] * nx + tc[:, 3]
        ref[b][:, idx] = pf[m].T
    ref = ref.reshape(inferred_batch_size, c_before * nz, ny, nx)

    assert out.shape == ref.shape, (out.shape, ref.shape)
    np.testing.assert_allclose(np.asarray(out), ref, rtol=0, atol=0)
    print("KERNEL_OK")
</pallas_src>

<mosaic_0001>
module attributes {stable_mosaic.version = 11 : i64} {
  func.func @_scatter_kernel(%arg0: i32, %arg1: i32, %arg2: memref<9xi32, #tpu.memory_space<smem>>, %arg3: memref<44xi32, #tpu.memory_space<smem>>, %arg4: memref<44x32xf32, #tpu.memory_space<vmem>>, %arg5: memref<1x32x128xf32, #tpu.memory_space<vmem>>, %arg6: memref<128x128xf32, #tpu.memory_space<vmem>>) attributes {dimension_semantics = [#tpu.dimension_semantics<parallel>, #tpu.dimension_semantics<parallel>], iteration_bounds = array<i64: 2, 4>, scalar_prefetch = 2 : i64, scratch_operands = 1 : i64, tpu.core_type = #tpu.core_type<tc>, window_params = [{pipeline_mode = #tpu.pipeline_mode<synchronous>, transform_indices = @transform_0, window_bounds = array<i64: 44, 32>}, {transform_indices = @transform_1, window_bounds = array<i64: 1, 32, 128>}]} {
    %c4_i32 = arith.constant 4 : i32
    %0 = arith.muli %arg0, %c4_i32 : i32
    %1 = arith.addi %0, %arg1 : i32
    %2 = arith.index_cast %1 : i32 to index
    %3 = memref.load %arg2[%2] : memref<9xi32, #tpu.memory_space<smem>>
    %c1_i32 = arith.constant 1 : i32
    %4 = arith.addi %1, %c1_i32 : i32
    %5 = arith.index_cast %4 : i32 to index
    %6 = memref.load %arg2[%5] : memref<9xi32, #tpu.memory_space<smem>>
    %c128_i32 = arith.constant 128 : i32
    %7 = arith.muli %arg1, %c128_i32 : i32
    %8 = arith.cmpi eq, %3, %6 : i32
    %9 = arith.extui %8 : i1 to i32
    %c0_i32 = arith.constant 0 : i32
    %10 = arith.cmpi ne, %9, %c0_i32 : i32
    scf.if %10 {
      %cst = arith.constant 0.000000e+00 : f32
      %14 = vector.broadcast %cst : f32 to vector<32x128xf32>
      %c0 = arith.constant 0 : index
      %c0_1 = arith.constant 0 : index
      %c0_2 = arith.constant 0 : index
      %15 = vector.load %arg5[%c0, %c0_1, %c0_2] : memref<1x32x128xf32, #tpu.memory_space<vmem>>, vector<1x32x128xf32>
      %16 = vector.shape_cast %15 : vector<1x32x128xf32> to vector<32x128xf32>
      %17 = vector.shape_cast %14 : vector<32x128xf32> to vector<1x32x128xf32>
      tpu.vector_store %arg5[%c0, %c0_1, %c0_2], %17 {strides = array<i32>} : memref<1x32x128xf32, #tpu.memory_space<vmem>>, vector<1x32x128xf32>,
    } else {
    }
    %11 = arith.cmpi slt, %3, %6 : i32
    %12 = arith.extui %11 : i1 to i32
    %c0_i32_0 = arith.constant 0 : i32
    %13 = arith.cmpi ne, %12, %c0_i32_0 : i32
    scf.if %13 {
      %cst = arith.constant 0.000000e+00 : f32
      %14 = vector.broadcast %cst : f32 to vector<128x128xf32>
      %c0 = arith.constant 0 : index
      %c0_1 = arith.constant 0 : index
      %15 = vector.load %arg6[%c0, %c0_1] : memref<128x128xf32, #tpu.memory_space<vmem>>, vector<128x128xf32>
      tpu.vector_store %arg6[%c0, %c0_1], %14 {strides = array<i32>} : memref<128x128xf32, #tpu.memory_space<vmem>>, vector<128x128xf32>,
      %c0_i32_2 = arith.constant 0 : i32
      %16 = arith.subi %6, %3 : i32
      %17 = arith.addi %3, %16 : i32
      %c1_i32_3 = arith.constant 1 : i32
      scf.for %arg7 = %3 to %17 step %c1_i32_3  : i32 {
        %24 = arith.index_cast %arg7 : i32 to index
        %25 = memref.load %arg3[%24] : memref<44xi32, #tpu.memory_space<smem>>
        %26 = arith.subi %25, %7 : i32
        %27 = arith.index_cast %arg7 : i32 to index
        %c0_9 = arith.constant 0 : index
        %28 = vector.load %arg4[%27, %c0_9] : memref<44x32xf32, #tpu.memory_space<vmem>>, vector<1x32xf32>
        %29 = arith.index_cast %26 : i32 to index
        %c0_10 = arith.constant 0 : index
        %30 = vector.load %arg6[%29, %c0_10] : memref<128x128xf32, #tpu.memory_space<vmem>>, vector<1x32xf32>
        tpu.vector_store %arg6[%29, %c0_10], %28 {strides = array<i32>} : memref<128x128xf32, #tpu.memory_space<vmem>>, vector<1x32xf32>,
      }
      %c0_4 = arith.constant 0 : index
      %c0_5 = arith.constant 0 : index
      %18 = vector.load %arg6[%c0_4, %c0_5] : memref<128x128xf32, #tpu.memory_space<vmem>>, vector<128x128xf32>
      %19 = tpu.transpose %18, [1, 0] : vector<128x128xf32> -> vector<128x128xf32>
      %20 = vector.extract_strided_slice %19 {offsets = [0, 0], sizes = [32, 128], strides = [1, 1]} : vector<128x128xf32> to vector<32x128xf32>
      %c0_6 = arith.constant 0 : index
      %c0_7 = arith.constant 0 : index
      %c0_8 = arith.constant 0 : index
      %21 = vector.load %arg5[%c0_6, %c0_7, %c0_8] : memref<1x32x128xf32, #tpu.memory_space<vmem>>, vector<1x32x128xf32>
      %22 = vector.shape_cast %21 : vector<1x32x128xf32> to vector<32x128xf32>
      %23 = vector.shape_cast %20 : vector<32x128xf32> to vector<1x32x128xf32>
      tpu.vector_store %arg5[%c0_6, %c0_7, %c0_8], %23 {strides = array<i32>} : memref<1x32x128xf32, #tpu.memory_space<vmem>>, vector<1x32x128xf32>,
    } else {
    }
    return
  }
  func.func @transform_0(%arg0: i32, %arg1: i32, %arg2: memref<9xi32, #tpu.memory_space<smem>>, %arg3: memref<44xi32, #tpu.memory_space<smem>>) -> (i32, i32) {
    %c0_i32 = arith.constant 0 : i32
    %c0_i32_0 = arith.constant 0 : i32
    %c0_i32_1 = arith.constant 0 : i32
    return %c0_i32, %c0_i32_0 : i32, i32
  }
  func.func @transform_1(%arg0: i32, %arg1: i32, %arg2: memref<9xi32, #tpu.memory_space<smem>>, %arg3: memref<44xi32, #tpu.memory_space<smem>>) -> (i32, i32, i32) {
    %c0_i32 = arith.constant 0 : i32
    %c0_i32_0 = arith.constant 0 : i32
    return %arg0, %c0_i32, %arg1 : i32, i32, i32
  }
}

</mosaic_0001>

<llo_original>
// kernel: tpu_custom_call.1
$region0: #{tpu_custom_call.1}
  #allocation0 [shape = 'u32[]', space=smem, size = 0x4, offset = 0x4, fixed_abs, tag = 'smem constant byte address 0x4 - core index']
  #allocation1 [shape = 'u32[144,128]{1,0:T(1,128)}', space=vmem, size = 0x12000, scoped, tag = 'internal scratch']
  #allocation2 [shape = 'f32[128,128]{1,0:T(8,128)}', space=vmem, size = 0x10000, scoped, tag = 'scratch operand']
  #allocation3 [shape = 's32[1]{0}', space=sflag, size = 0x4, scoped, tag = 'scoped memory for tpu_custom_call.1']
  #allocation4 [shape = 'u8[512]{0}', space=smem, size = 0x200, scoped, tag = 'prefetched SMEM operand 0']
  #allocation5 [shape = 'u8[512]{0}', space=smem, size = 0x200, scoped, tag = 'prefetched SMEM operand 1']
  %s0 = inlined_call_operand.vmem [shape: s32[9], index: 0, kind: input, shape index: {}]
  %s1 = inlined_call_operand.vmem [shape: s32[44], index: 1, kind: input, shape index: {}]
  %s2 = inlined_call_operand.vmem [shape: f32[44,32], index: 2, kind: input, shape index: {}]
  %s3 = inlined_call_operand.hbm [shape: f32[2,32,512], index: 3, kind: output, shape index: {}]
  %s4 = sld [smem:[#allocation0]]
  $region52: #{tpu_custom_call.1} parent=0
    _
  %s6 = ssub.s32 1, %s4
  %s7 = scalar_select 0, %s6, %s4
  %s8 = sshll.u32 %s0, 4
  %s9 = int_to_ptr.vmem [resolvable:$true] %s8
  %11 = dma.vmem_to_smem %s9, 16, [#allocation4], [#allocation3]
  %s12 = sshll.u32 %s1, 4
  %s13 = int_to_ptr.vmem [resolvable:$true] %s12
  %15 = dma.vmem_to_smem %s13, 16, [#allocation5], [#allocation3]
  %16 = dma.done [#allocation3], 32
  %17 = sfence
  $region1: #{tpu_custom_call.1} parent=0
    #allocation6 [shape = 'u8[32768]{0}', space=vmem, size = 0x8000, scoped, tag = 'output window, operand 0']
    #allocation7 [shape = 's32[2]{0}', space=sflag, size = 0x8, scoped, tag = 'scoped memory for tpu_custom_call.1']
    %18 = vsyncpa [#allocation7], 0
    %s19 = scalar_lea.sflag [#allocation7], 1
    %20 = vsyncpa %s19, 0
    loop: start=0, step=1, limit=10
    $region2: #{tpu_custom_call.1} parent=1 // loop_pre_header
      _
    $region3: #{tpu_custom_call.1} parent=1 // loop_header
      %s22 = sphi 0, %s26
      %p23 = scmp.ge.s32.totalorder %s22, 10
      %s29 = sphi 0, %s41
      %s30 = sphi 0, %s37
      %s31 = sphi 0, %s29
      %s32 = sphi 0, %s30
      %s33 = sphi 0, %s31
      %s34 = sphi 0, %s32
      %s42 = sphi 0, %s42
      %s44 = sphi 0, %s42
      %s45 = sphi 0, %s44
      %s59 = sphi 0, %s45
      %s67 = sphi 0, %s69
      %s70 = sphi 0, %s67
      %s71 = sphi 0, %s70
      %s87 = sphi 0, %s71
    $region4: #{tpu_custom_call.1} parent=1 // loop_header_branch
      %25 = sbr.rel (%p23) target = $region8
    $region5: #{tpu_custom_call.1} parent=1 // loop_body
      %s27 = ssub.s32 %s22, 1
      %s28 = ssub.s32 %s22, 2
      %s35 = sadd.s32 1, %s30
      %p36 = scmp.ge.s32.totalorder %s35, 4
      %s37 = scalar_select %p36, 0, %s35
      %s38 = sadd.s32 1, %s29
      %s39 = scalar_select %p36, %s38, %s29
      %p40 = scmp.ge.s32.totalorder %s39, 2
      %s41 = scalar_select %p40, 0, %s39
      %s43 = sadd.s32 %s42, 1
      %p46 = scmp.eq.s32.totalorder %s22, 7
      %p47 = scmp.ne.s32.totalorder %s42, %s44
      %p48 = scmp.eq.s32.totalorder %s22, 0
      %p49 = por %p47, %p48
      %p50 = scmp.ne.s32.totalorder %s42, %s44
      %p51 = scmp.eq.s32.totalorder %s27, 7
      %p52 = por %p50, %p51
      %p53 = scmp.ne.s32.totalorder %s44, %s45
      %p54 = scmp.eq.s32.totalorder %s27, 0
      %p55 = por %p53, %p54
      %p56 = scmp.ne.s32.totalorder %s44, %s45
      %p57 = scmp.eq.s32.totalorder %s28, 7
      %p58 = por %p56, %p57
      %p60 = scmp.ne.s32.totalorder %s45, %s59
      %p61 = scmp.eq.s32.totalorder %s28, 0
      %p62 = por %p60, %p61
      %s63 = ssub.s32 %s29, %s41
      %s64 = ssub.s32 %s30, %s37
      %s65 = sor.u32 %s63, %s64
      %p66 = scmp.eq.s32.totalorder %s65, 0
      %s68 = sadd.s32 %s67, 1
      %s69 = scalar_select %p66, %s67, %s68
      %p72 = pneg %p66
      %p73 = scmp.eq.s32.totalorder %s22, 7
      %p74 = por %p72, %p73
      %p75 = scmp.ne.s32.totalorder %s67, %s70
      %p76 = scmp.eq.s32.totalorder %s22, 0
      %p77 = por %p75, %p76
      %p78 = scmp.ne.s32.totalorder %s67, %s70
      %p79 = scmp.eq.s32.totalorder %s27, 7
      %p80 = por %p78, %p79
      %p81 = scmp.ne.s32.totalorder %s70, %s71
      %p82 = scmp.eq.s32.totalorder %s27, 0
      %p83 = por %p81, %p82
      %p84 = scmp.ne.s32.totalorder %s70, %s71
      %p85 = scmp.eq.s32.totalorder %s28, 7
      %p86 = por %p84, %p85
      %p88 = scmp.ne.s32.totalorder %s71, %s87
      %p89 = scmp.eq.s32.totalorder %s28, 0
      %p90 = por %p88, %p89
      %p91 = scmp.le.s32.totalorder 1, %s22
      %p92 = scmp.lt.s32.totalorder %s22, 9
      %p93 = pnand %p91, %p92
      %p94 = pneg %p93
      // Predicated region
      $region9: #{tpu_custom_call.1} parent=5 // pred_check
        _
      $region10: #{tpu_custom_call.1} parent=5 // pred_check_branch
        %96 = sbr.rel (%p93) target = $region12
      $region11: #{tpu_custom_call.1} parent=5 // pred_region
        %s97 = ssub.s32 %s22, 1
        // Predicated region
        $region13: #{tpu_custom_call.1} parent=11 // pred_check
          %p98 = pneg %p55
        $region14: #{tpu_custom_call.1} parent=11 // pred_check_branch
          %100 = sbr.rel (%p98) target = $region16
        $region15: #{tpu_custom_call.1} parent=11 // pred_region
          _
        $region16: #{tpu_custom_call.1} parent=11 // pred_fallthru
          _
      $region12: #{tpu_custom_call.1} parent=5 // pred_fallthru
        _
      %p101 = scmp.lt.s32.totalorder %s22, 8
      // Predicated region
      $region17: #{tpu_custom_call.1} parent=5 // pred_check
        %p102 = pneg %p101
      $region18: #{tpu_custom_call.1} parent=5 // pred_check_branch
        %104 = sbr.rel (%p102) target = $region20
      $region19: #{tpu_custom_call.1} parent=5 // pred_region
        _
      $region20: #{tpu_custom_call.1} parent=5 // pred_fallthru
        _
      %p105 = scmp.le.s32.totalorder 1, %s22
      %p106 = scmp.lt.s32.totalorder %s22, 9
      %p107 = pnand %p105, %p106
      %p108 = pneg %p107
      // Predicated region
      $region21: #{tpu_custom_call.1} parent=5 // pred_check
        _
      $region22: #{tpu_custom_call.1} parent=5 // pred_check_branch
        %110 = sbr.rel (%p107) target = $region24
      $region23: #{tpu_custom_call.1} parent=5 // pred_region
        %s111 = ssub.s32 %s22, 1
        %p112 = pneg %p55
        %p113 = pneg %p52
        %p114 = pneg %p83
        %p115 = pneg %p80
        %s116 = sand.u32 %s70, 1
        %s117 = scalar_lea.sflag [#allocation7], %s116
        %s118 = sand.u32 %s70, 1
        %s119 = smul.addr %s118, 32
        %s120 = scalar_lea.vmem [#allocation6], %s119
        %s121 = smul.u32 %s31, 4
        %s122 = sadd.s32 %s121, %s32
        %s123 = sld [smem:[#allocation4 + %s122]]
        %s124 = sadd.s32 %s122, 1
        %s125 = sld [smem:[#allocation4 + %s124]]
        %s126 = smul.u32 %s32, 128
        %p127 = scmp.eq.s32.totalorder %s123, %s125
        // Predicated region
        $region25: #{tpu_custom_call.1} parent=23 // pred_check
          %p128 = pneg %p127
        $region26: #{tpu_custom_call.1} parent=23 // pred_check_branch
          %130 = sbr.rel (%p128) target = $region28
        $region27: #{tpu_custom_call.1} parent=23 // pred_region
          %131 = vst [vmem:[%s120] sm:$0xff] 0.0
          %132 = vst [vmem:[%s120 + $0x8] sm:$0xff] 0.0
          %133 = vst [vmem:[%s120 + $0x10] sm:$0xff] 0.0
          %134 = vst [vmem:[%s120 + $0x18] sm:$0xff] 0.0
        $region28: #{tpu_custom_call.1} parent=23 // pred_fallthru
          _
        %p135 = scmp.lt.s32.totalorder %s123, %s125
        // Predicated region
        $region29: #{tpu_custom_call.1} parent=23 // pred_check
          %p136 = pneg %p135
        $region30: #{tpu_custom_call.1} parent=23 // pred_check_branch
          %138 = sbr.rel (%p136) target = $region32
        $region31: #{tpu_custom_call.1} parent=23 // pred_region
          %139 = vst [vmem:[#allocation2] sm:$0xff] 0.0
          %140 = vst [vmem:[#allocation2 + $0x8] sm:$0xff] 0.0
          %141 = vst [vmem:[#allocation2 + $0x10] sm:$0xff] 0.0
          %142 = vst [vmem:[#allocation2 + $0x18] sm:$0xff] 0.0
          %143 = vst [vmem:[#allocation2 + $0x20] sm:$0xff] 0.0
          %144 = vst [vmem:[#allocation2 + $0x28] sm:$0xff] 0.0
          %145 = vst [vmem:[#allocation2 + $0x30] sm:$0xff] 0.0
          %146 = vst [vmem:[#allocation2 + $0x38] sm:$0xff] 0.0
          %147 = vst [vmem:[#allocation2 + $0x40] sm:$0xff] 0.0
          %148 = vst [vmem:[#allocation2 + $0x48] sm:$0xff] 0.0
          %149 = vst [vmem:[#allocation2 + $0x50] sm:$0xff] 0.0
          %150 = vst [vmem:[#allocation2 + $0x58] sm:$0xff] 0.0
          %151 = vst [vmem:[#allocation2 + $0x60] sm:$0xff] 0.0
          %152 = vst [vmem:[#allocation2 + $0x68] sm:$0xff] 0.0
          %153 = vst [vmem:[#allocation2 + $0x70] sm:$0xff] 0.0
          %154 = vst [vmem:[#allocation2 + $0x78] sm:$0xff] 0.0
          // While loop
          $region33: #{tpu_custom_call.1} parent=31 // loop_pre_header
            _
          $region34: #{tpu_custom_call.1} parent=31 // loop_header
            %s156 = sphi %s123, %s158
            %p157 = scmp.ge.s32.totalorder %s156, %s125
          $region35: #{tpu_custom_call.1} parent=31 // loop_header_branch
            %160 = sbr.rel (%p157) target = $region39
          $region36: #{tpu_custom_call.1} parent=31 // loop_body
            %s161 = sld [smem:[#allocation5 + %s156]]
            %s162 = ssub.s32 %s161, %s126
            %s163 = scalar_lea.vmem %s2, %s156
            %v164 = vld [vmem:[%s163] sm:$0x1]
            %s165 = scalar_lea.vmem [#allocation2], %s162
            %vm166 = vcmask 253952
            %167 = vst.msk [vmem:[%s165] sm:$0x1] %vm166, %v164
          $region37: #{tpu_custom_call.1} parent=31 // loop_footer
            %s158 = sadd.s32 %s156, 1
          $region38: #{tpu_custom_call.1} parent=31 // loop_footer_branch
            %155 = sbr.rel target = $region34
          $region39: #{tpu_custom_call.1} parent=31 // loop_exit
            _
          %v168 = vld [vmem:[#allocation2] sm:$0xff]
          %v169 = vld [vmem:[#allocation2 + $0x8] sm:$0xff]
          %v170 = vld [vmem:[#allocation2 + $0x10] sm:$0xff]
          %v171 = vld [vmem:[#allocation2 + $0x18] sm:$0xff]
          %v172 = vld [vmem:[#allocation2 + $0x20] sm:$0xff]
          %v173 = vld [vmem:[#allocation2 + $0x28] sm:$0xff]
          %v174 = vld [vmem:[#allocation2 + $0x30] sm:$0xff]
          %v175 = vld [vmem:[#allocation2 + $0x38] sm:$0xff]
          %v176 = vld [vmem:[#allocation2 + $0x40] sm:$0xff]
          %v177 = vld [vmem:[#allocation2 + $0x48] sm:$0xff]
          %v178 = vld [vmem:[#allocation2 + $0x50] sm:$0xff]
          %v179 = vld [vmem:[#allocation2 + $0x58] sm:$0xff]
          %v180 = vld [vmem:[#allocation2 + $0x60] sm:$0xff]
          %v181 = vld [vmem:[#allocation2 + $0x68] sm:$0xff]
          %v182 = vld [vmem:[#allocation2 + $0x70] sm:$0xff]
          %v183 = vld [vmem:[#allocation2 + $0x78] sm:$0xff]
          %184 = vxpose.xlu0.b32.start [1/16] %v168, 128
          %185 = vxpose.xlu0.b32.cont [2/16] %v169, 128
          %186 = vxpose.xlu0.b32.cont [3/16] %v170, 128
          %187 = vxpose.xlu0.b32.cont [4/16] %v171, 128
          %188 = vxpose.xlu0.b32.cont [5/16] %v172, 128
          %189 = vxpose.xlu0.b32.cont [6/16] %v173, 128
          %190 = vxpose.xlu0.b32.cont [7/16] %v174, 128
          %191 = vxpose.xlu0.b32.cont [8/16] %v175, 128
          %192 = vxpose.xlu0.b32.cont [9/16] %v176, 128
          %193 = vxpose.xlu0.b32.cont [10/16] %v177, 128
          %194 = vxpose.xlu0.b32.cont [11/16] %v178, 128
          %195 = vxpose.xlu0.b32.cont [12/16] %v179, 128
          %196 = vxpose.xlu0.b32.cont [13/16] %v180, 128
          %197 = vxpose.xlu0.b32.cont [14/16] %v181, 128
          %198 = vxpose.xlu0.b32.cont [15/16] %v182, 128
          %199 = vxpose.xlu0.b32.end [16/16] %v183, 128
          %v200 = vpop.trf.xlu0
          %v201 = vpop.trf.xlu0
          %v202 = vpop.trf.xlu0
          %v203 = vpop.trf.xlu0
          %v204 = vpop.trf.xlu0
          %v205 = vpop.trf.xlu0
          %v206 = vpop.trf.xlu0
          %v207 = vpop.trf.xlu0
          %v208 = vpop.trf.xlu0
          %v209 = vpop.trf.xlu0
          %v210 = vpop.trf.xlu0
          %v211 = vpop.trf.xlu0
          %v212 = vpop.trf.xlu0
          %v213 = vpop.trf.xlu0
          %v214 = vpop.trf.xlu0
          %v215 = vpop.trf.xlu0
          %216 = vst [vmem:[%s120] sm:$0xff] %v200
          %217 = vst [vmem:[%s120 + $0x8] sm:$0xff] %v201
          %218 = vst [vmem:[%s120 + $0x10] sm:$0xff] %v202
          %219 = vst [vmem:[%s120 + $0x18] sm:$0xff] %v203
        $region32: #{tpu_custom_call.1} parent=23 // pred_fallthru
          _
        %s220 = sand.u32 %s70, 1
        %s221 = scalar_lea.sflag [#allocation7], %s220
        %s222 = sand.u32 %s70, 1
        %s223 = smul.addr %s222, 32
        %s224 = scalar_lea.vmem [#allocation6], %s223
        // Predicated region
        $region40: #{tpu_custom_call.1} parent=23 // pred_check
          %p225 = pneg %p80
        $region41: #{tpu_custom_call.1} parent=23 // pred_check_branch
          %227 = sbr.rel (%p225) target = $region43
        $region42: #{tpu_custom_call.1} parent=23 // pred_region
          %s229 = ssub.s32 512, 512
          %230 = vsyncadd %s221, %s229
          %s231 = smul.addr %s31, 16
          %s232 = sadd.s32 %s32, %s231
          %s233 = smul.addr %s232, 128
          %s234 = scalar_lea.hbm %s3, %s233
          %s235 = sshll.u32 %s224, 4
          %s236 = int_to_ptr.vmem [resolvable:$true] %s235
          %241 = dma.vmem_to_hbm [thread:$0]  %s236, 512, %s234, %s221, 128, 512, 8
        $region43: #{tpu_custom_call.1} parent=23 // pred_fallthru
          _
      $region24: #{tpu_custom_call.1} parent=5 // pred_fallthru
        _
      %p242 = scmp.le.s32.totalorder 2, %s22
      // Predicated region
      $region44: #{tpu_custom_call.1} parent=5 // pred_check
        %p243 = pneg %p242
      $region45: #{tpu_custom_call.1} parent=5 // pred_check_branch
        %245 = sbr.rel (%p243) target = $region47
      $region46: #{tpu_custom_call.1} parent=5 // pred_region
        %s246 = ssub.s32 %s22, 2
        // Predicated region
        $region48: #{tpu_custom_call.1} parent=46 // pred_check
          %p247 = pneg %p86
        $region49: #{tpu_custom_call.1} parent=46 // pred_check_branch
          %249 = sbr.rel (%p247) target = $region51
        $region50: #{tpu_custom_call.1} parent=46 // pred_region
          %s250 = sand.u32 %s71, 1
          %s251 = scalar_lea.sflag [#allocation7], %s250
          %s252 = sand.u32 %s71, 1
          %s253 = smul.addr %s252, 32
          %s254 = scalar_lea.vmem [#allocation6], %s253
          %255 = dma.done %s251, 512
        $region51: #{tpu_custom_call.1} parent=46 // pred_fallthru
          _
      $region47: #{tpu_custom_call.1} parent=5 // pred_fallthru
        _
    $region6: #{tpu_custom_call.1} parent=1 // loop_footer
      %s26 = sadd.s32 1, %s22
    $region7: #{tpu_custom_call.1} parent=1 // loop_footer_branch
      %21 = sbr.rel target = $region3
    $region8: #{tpu_custom_call.1} parent=1 // loop_exit
      _
    %256 = vsyncpa [#allocation7], 1
    %s257 = scalar_lea.sflag [#allocation7], 1
    %258 = vsyncpa %s257, 1

</llo_original>
